<compile_context>
chip_gen: v6e
topology: v6e:2x2x1
jax: 0.10.0
libtpu: 0.0.40
codegen_flags: <defaults>
</compile_context>

<pallas_src>
import functools
import math

import jax
import jax.numpy as jnp
from jax import lax
from jax.experimental import pallas as pl
from jax.experimental.pallas import tpu as pltpu


def _mha_kernel(x_ref, w_qkv_ref, b_qkv_ref, o_ref, *, num_heads):
    S, dim = x_ref.shape
    hd = dim // num_heads

    x = x_ref[...]                                               # (S, dim)

    # One fused projection matmul: (S, dim) @ (dim, 3*dim).  96 output lanes
    # still fit one MXU tile, so this costs the same as ONE of the previous
    # three matmuls.  1/sqrt(head_dim) is already folded into W_q / b_q.
    qkv = jnp.dot(x, w_qkv_ref[...],
                  preferred_element_type=jnp.float32) + b_qkv_ref[...]

    # Head-leading views (H, S, hd) so all heads go through the MXU in two
    # batched passes instead of H tiny 8x8x8 matmuls + a lane concat.
    def to_heads(y):
        return jnp.transpose(y.reshape(S, num_heads, hd), (1, 0, 2))

    q = to_heads(qkv[:, 0 * dim:1 * dim])
    k = to_heads(qkv[:, 1 * dim:2 * dim])
    v = to_heads(qkv[:, 2 * dim:3 * dim])

    # All-head scores in one batched matmul: (H, S, S).
    s = jnp.einsum('hqd,hkd->hqk', q, k, preferred_element_type=jnp.float32)

    # Numerically stable softmax over the whole (H, S, S) slab in one
    # streaming VPU/EUP pass.  Exact divide: the denominator is an (H,S,1)
    # vector, so the approximate reciprocal buys nothing and costs accuracy.
    m = jnp.max(s, axis=-1, keepdims=True)
    e = jnp.exp(s - m)
    p = e / jnp.sum(e, axis=-1, keepdims=True)

    # All-head PV in one batched matmul: (H, S, hd).
    o = jnp.einsum('hqk,hkd->hqd', p, v, preferred_element_type=jnp.float32)

    # torch.hstack(attn_res): fold heads back onto lanes and do ONE
    # lane-dense (S, dim) store.
    o_ref[...] = jnp.transpose(o, (1, 0, 2)).reshape(S, dim)


def _block_diag_transposed(w):
    """(H, out, in) per-head PyTorch Linear weights -> (dim_in, dim_out)
    block-diagonal matrix such that
      (x @ Wbd)[:, h*hd:(h+1)*hd] == x[:, h*hd:(h+1)*hd] @ w[h].T.
    One-time wrapper-side layout plumbing (zero in-kernel cost)."""
    H, o, i = w.shape
    wt = jnp.transpose(w, (0, 2, 1))                    # (H, in, out)
    eye = jnp.eye(H, dtype=w.dtype)
    return jnp.einsum('gh,hio->giho', eye, wt).reshape(H * i, H * o)


def multi_head_attention_encoder(linear_embed, params, num_heads):
    """Pallas forward matching the PyTorch reference semantics exactly."""
    B, S, dim = linear_embed.shape
    hd = dim // num_heads
    wq, bq, wk, bk, wv, bv = params  # wq/wk/wv: (H, hd, hd); bq/bk/bv: (H, 1, hd)

    # Reference quirk: only the last image contributes to the output.
    x_last = linear_embed[-1]                            # (S, dim), lane-dense

    inv_scale = 1.0 / math.sqrt(hd)

    # Wrapper-side, one-time layout plumbing:
    #   * per-head weights -> block-diagonal (dim, dim), pre-transposed to
    #     (in, out) so the kernel never transposes weights;
    #   * 1/sqrt(head_dim) folded into the Q weights/bias;
    #   * Q/K/V fused along lanes into a single (dim, 3*dim) weight and a
    #     (1, 3*dim) bias so the kernel does ONE projection matmul.
    wq_bd = _block_diag_transposed(wq) * inv_scale
    wk_bd = _block_diag_transposed(wk)
    wv_bd = _block_diag_transposed(wv)
    w_qkv = jnp.concatenate([wq_bd, wk_bd, wv_bd], axis=1)        # (dim, 3*dim)
    b_qkv = jnp.concatenate([bq.reshape(1, dim) * inv_scale,
                             bk.reshape(1, dim),
                             bv.reshape(1, dim)], axis=1)         # (1, 3*dim)

    kernel = functools.partial(_mha_kernel, num_heads=num_heads)

    # Single gridless invocation; all operands explicitly VMEM-resident
    # (total < 20 KiB on every generation).
    vmem = functools.partial(pl.BlockSpec, memory_space=pltpu.MemorySpace.VMEM)
    out = pl.pallas_call(
        kernel,
        out_shape=jax.ShapeDtypeStruct((S, dim), jnp.float32),
        in_specs=[vmem(), vmem(), vmem()],
        out_specs=vmem(),
    )(x_last, w_qkv, b_qkv)

    # TODO(synk): at these shapes wall-clock is dominated by the pallas_call
    # dispatch itself; in production fuse this into the kernel producing
    # `linear_embed` or batch many (S, dim) slabs over a leading "parallel"
    # grid axis (2-TensorCore win on v7x).
    # TODO(synk): for large S, KV-tile the softmax flash-style and set
    # vmem_limit_bytes (v7x: 64 MiB physical / 32 MiB default scoped VMEM).

    # torch.unsqueeze + torch.cat of the single surviving element.
    return out[None, :, :]


def _init_params(key, num_heads, head_dim):
    """Deterministic per-head Linear params, mimicking PyTorch default init."""
    bound = 1.0 / math.sqrt(head_dim)
    keys = jax.random.split(key, 6)
    shape_w = (num_heads, head_dim, head_dim)   # (out_features, in_features) per head
    shape_b = (num_heads, 1, head_dim)
    wq = jax.random.uniform(keys[0], shape_w, jnp.float32, -bound, bound)
    bq = jax.random.uniform(keys[1], shape_b, jnp.float32, -bound, bound)
    wk = jax.random.uniform(keys[2], shape_w, jnp.float32, -bound, bound)
    bk = jax.random.uniform(keys[3], shape_b, jnp.float32, -bound, bound)
    wv = jax.random.uniform(keys[4], shape_w, jnp.float32, -bound, bound)
    bv = jax.random.uniform(keys[5], shape_b, jnp.float32, -bound, bound)
    return wq, bq, wk, bk, wv, bv


def _reference_jax(linear_embed, params, num_heads):
    """Pure-JAX re-implementation of the PyTorch forward (for validation)."""
    B, S, dim = linear_embed.shape
    hd = dim // num_heads
    wq, bq, wk, bk, wv, bv = params
    hp = lax.Precision.HIGHEST
    img = linear_embed[-1]  # only the last image survives in the reference
    heads = []
    for h in range(num_heads):
        hx = img[:, h * hd:(h + 1) * hd]
        q = jnp.dot(hx, wq[h].T, precision=hp) + bq[h]
        k = jnp.dot(hx, wk[h].T, precision=hp) + bk[h]
        v = jnp.dot(hx, wv[h].T, precision=hp) + bv[h]
        s = jnp.dot(q, k.T, precision=hp) / math.sqrt(hd)
        p = jax.nn.softmax(s, axis=-1)
        heads.append(jnp.dot(p, v, precision=hp))
    return jnp.concatenate(heads, axis=-1)[None]


if __name__ == "__main__":
    B, S, dim, num_heads = 2, 8, 32, 4
    head_dim = dim // num_heads

    key = jax.random.PRNGKey(0)
    k_x, k_p = jax.random.split(key)
    linear_embed = jax.random.normal(k_x, (B, S, dim), dtype=jnp.float32)
    params = _init_params(k_p, num_heads, head_dim)

    out = multi_head_attention_encoder(linear_embed, params, num_heads)
    out = jax.block_until_ready(out)

    ref = _reference_jax(linear_embed, params, num_heads)
    assert out.shape == (1, S, dim), out.shape
    assert jnp.allclose(out, ref, atol=2e-3, rtol=2e-3), "mismatch vs reference"

    print("KERNEL_OK")
</pallas_src>

<mosaic_0001>
module attributes {stable_mosaic.version = 11 : i64} {
  func.func @_mha_kernel(%arg0: memref<8x32xf32, #tpu.memory_space<vmem>>, %arg1: memref<32x96xf32, #tpu.memory_space<vmem>>, %arg2: memref<1x96xf32, #tpu.memory_space<vmem>>, %arg3: memref<8x32xf32, #tpu.memory_space<vmem>>) attributes {dimension_semantics = [], scalar_prefetch = 0 : i64, scratch_operands = 0 : i64, tpu.core_type = #tpu.core_type<tc>} {
    %c0 = arith.constant 0 : index
    %c0_0 = arith.constant 0 : index
    %0 = vector.load %arg0[%c0, %c0_0] : memref<8x32xf32, #tpu.memory_space<vmem>>, vector<8x32xf32>
    %c0_1 = arith.constant 0 : index
    %c0_2 = arith.constant 0 : index
    %1 = vector.load %arg1[%c0_1, %c0_2] : memref<32x96xf32, #tpu.memory_space<vmem>>, vector<32x96xf32>
    %cst = arith.constant dense<0.000000e+00> : vector<8x96xf32>
    %2 = tpu.matmul %0, %1, %cst {dimension_numbers = #tpu.dot_dimension_numbers<[1], [0], [0], [1], [0, 0, 1, 1], [], []>} : vector<8x32xf32>, vector<32x96xf32>, vector<8x96xf32> -> vector<8x96xf32>
    %c0_3 = arith.constant 0 : index
    %c0_4 = arith.constant 0 : index
    %3 = vector.load %arg2[%c0_3, %c0_4] : memref<1x96xf32, #tpu.memory_space<vmem>>, vector<1x96xf32>
    %4 = vector.broadcast %3 : vector<1x96xf32> to vector<8x96xf32>
    %5 = arith.addf %2, %4 : vector<8x96xf32>
    %6 = vector.extract_strided_slice %5 {offsets = [0, 0], sizes = [8, 32], strides = [1, 1]} : vector<8x96xf32> to vector<8x32xf32>
    %7 = vector.shape_cast %6 : vector<8x32xf32> to vector<8x4x8xf32>
    %8 = tpu.transpose %7, [1, 0, 2] : vector<8x4x8xf32> -> vector<4x8x8xf32>
    %9 = vector.extract_strided_slice %5 {offsets = [0, 32], sizes = [8, 32], strides = [1, 1]} : vector<8x96xf32> to vector<8x32xf32>
    %10 = vector.shape_cast %9 : vector<8x32xf32> to vector<8x4x8xf32>
    %11 = tpu.transpose %10, [1, 0, 2] : vector<8x4x8xf32> -> vector<4x8x8xf32>
    %12 = vector.extract_strided_slice %5 {offsets = [0, 64], sizes = [8, 32], strides = [1, 1]} : vector<8x96xf32> to vector<8x32xf32>
    %13 = vector.shape_cast %12 : vector<8x32xf32> to vector<8x4x8xf32>
    %14 = tpu.transpose %13, [1, 0, 2] : vector<8x4x8xf32> -> vector<4x8x8xf32>
    "tpu.trace_start"() <{level = 10 : i32, message = "hqd,hkd->hqk"}> : () -> ()
    %cst_5 = arith.constant dense<0.000000e+00> : vector<4x8x8xf32>
    %15 = tpu.matmul %8, %11, %cst_5 {dimension_numbers = #tpu.dot_dimension_numbers<[2], [2], [1], [1], [0, 0, 0, 1, 1, 1], [0], [0]>} : vector<4x8x8xf32>, vector<4x8x8xf32>, vector<4x8x8xf32> -> vector<4x8x8xf32>
    "tpu.trace_stop"() : () -> ()
    %cst_6 = arith.constant dense<0xFF800000> : vector<4x8xf32>
    %16 = vector.multi_reduction <maximumf>, %15, %cst_6 [2] : vector<4x8x8xf32> to vector<4x8xf32>
    %17 = vector.shape_cast %16 : vector<4x8xf32> to vector<4x8x1xf32>
    %18 = vector.broadcast %17 : vector<4x8x1xf32> to vector<4x8x8xf32>
    %19 = arith.subf %15, %18 : vector<4x8x8xf32>
    %20 = math.exp %19 : vector<4x8x8xf32>
    %cst_7 = arith.constant dense<0.000000e+00> : vector<4x8xf32>
    %21 = vector.multi_reduction <add>, %20, %cst_7 [2] : vector<4x8x8xf32> to vector<4x8xf32>
    %22 = vector.shape_cast %21 : vector<4x8xf32> to vector<4x8x1xf32>
    %23 = vector.broadcast %22 : vector<4x8x1xf32> to vector<4x8x8xf32>
    %24 = arith.divf %20, %23 : vector<4x8x8xf32>
    "tpu.trace_start"() <{level = 10 : i32, message = "hqk,hkd->hqd"}> : () -> ()
    %cst_8 = arith.constant dense<0.000000e+00> : vector<4x8x8xf32>
    %25 = tpu.matmul %24, %14, %cst_8 {dimension_numbers = #tpu.dot_dimension_numbers<[2], [1], [1], [2], [0, 0, 0, 1, 1, 2], [0], [0]>} : vector<4x8x8xf32>, vector<4x8x8xf32>, vector<4x8x8xf32> -> vector<4x8x8xf32>
    "tpu.trace_stop"() : () -> ()
    %26 = tpu.transpose %25, [1, 0, 2] : vector<4x8x8xf32> -> vector<8x4x8xf32>
    %27 = vector.shape_cast %26 : vector<8x4x8xf32> to vector<8x32xf32>
    %c0_9 = arith.constant 0 : index
    %c0_10 = arith.constant 0 : index
    %28 = vector.load %arg3[%c0_9, %c0_10] : memref<8x32xf32, #tpu.memory_space<vmem>>, vector<8x32xf32>
    tpu.vector_store %arg3[%c0_9, %c0_10], %27 {strides = array<i32>} : memref<8x32xf32, #tpu.memory_space<vmem>>, vector<8x32xf32>,
    return
  }
}

</mosaic_0001>

<llo_original>
// kernel: tpu_custom_call.1
$region0: #{tpu_custom_call.1}
  #allocation0 [shape = 'u32[]', space=smem, size = 0x4, offset = 0x4, fixed_abs, tag = 'smem constant byte address 0x4 - core index']
  #allocation1 [shape = 'u32[144,128]{1,0:T(1,128)}', space=vmem, size = 0x12000, scoped, tag = 'internal scratch']
  %s0 = inlined_call_operand.hbm [shape: f32[8,32], index: 0, kind: input, shape index: {}]
  %s1 = inlined_call_operand.hbm [shape: f32[32,96], index: 1, kind: input, shape index: {}]
  %s2 = inlined_call_operand.vmem [shape: f32[1,96], index: 2, kind: input, shape index: {}]
  %s3 = inlined_call_operand.hbm [shape: f32[8,32], index: 3, kind: output, shape index: {}]
  %s4 = sld [smem:[#allocation0]]
  $region30: #{tpu_custom_call.1} parent=0
    _
  %s6 = ssub.s32 1, %s4
  %s7 = scalar_select 0, %s6, %s4
  $region1: #{tpu_custom_call.1} parent=0
    #allocation2 [shape = 'u8[4096]{0}', space=vmem, size = 0x1000, scoped, tag = 'input window, operand 0, single buffered']
    #allocation3 [shape = 's32[1]{0}', space=sflag, size = 0x4, scoped, tag = 'scoped memory for tpu_custom_call.1']
    #allocation4 [shape = 's32[1]{0}', space=sflag, size = 0x4, scoped, tag = 'scoped memory for tpu_custom_call.1']
    #allocation5 [shape = 'u8[16384]{0}', space=vmem, size = 0x4000, scoped, tag = 'input window, operand 1, single buffered']
    #allocation6 [shape = 's32[1]{0}', space=sflag, size = 0x4, scoped, tag = 'scoped memory for tpu_custom_call.1']
    #allocation7 [shape = 'u8[4096]{0}', space=vmem, size = 0x1000, scoped, tag = 'output window, operand 0, single buffered']
    %8 = vsyncpa [#allocation3], 0
    %9 = vsyncpa [#allocation6], 0
    %10 = vsyncpa [#allocation4], 0
    // Predicated region
    $region2: #{tpu_custom_call.1} parent=1 // pred_check
      _
    $region3: #{tpu_custom_call.1} parent=1 // pred_check_branch
      %12 = sbr.rel (0) target = $region5
    $region4: #{tpu_custom_call.1} parent=1 // pred_region
      %s14 = ssub.s32 128, 128
      %15 = vsyncadd [#allocation3], %s14
      %s17 = sshll.u32 [#allocation2], 4
      %s18 = int_to_ptr.vmem [resolvable:$true] %s17
      %20 = dma.hbm_to_vmem [thread:$0]  %s0, 128, %s18, [#allocation3]
    $region5: #{tpu_custom_call.1} parent=1 // pred_fallthru
      _
    // Predicated region
    $region6: #{tpu_custom_call.1} parent=1 // pred_check
      _
    $region7: #{tpu_custom_call.1} parent=1 // pred_check_branch
      %22 = sbr.rel (0) target = $region9
    $region8: #{tpu_custom_call.1} parent=1 // pred_region
      %s24 = ssub.s32 512, 512
      %25 = vsyncadd [#allocation6], %s24
      %s26 = sshll.u32 [#allocation5], 4
      %s27 = int_to_ptr.vmem [resolvable:$true] %s26
      %32 = dma.hbm_to_vmem [thread:$0]  %s1, 512, %s27, [#allocation6], 128, 128, 8
    $region9: #{tpu_custom_call.1} parent=1 // pred_fallthru
      _
    // Predicated region
    $region10: #{tpu_custom_call.1} parent=1 // pred_check
      _
    $region11: #{tpu_custom_call.1} parent=1 // pred_check_branch
      %34 = sbr.rel (0) target = $region13
    $region12: #{tpu_custom_call.1} parent=1 // pred_region
      _
    $region13: #{tpu_custom_call.1} parent=1 // pred_fallthru
      _
    // Predicated region
    $region14: #{tpu_custom_call.1} parent=1 // pred_check
      _
    $region15: #{tpu_custom_call.1} parent=1 // pred_check_branch
      %36 = sbr.rel (0) target = $region17
    $region16: #{tpu_custom_call.1} parent=1 // pred_region
      %37 = dma.done [#allocation3], 128
    $region17: #{tpu_custom_call.1} parent=1 // pred_fallthru
      _
    // Predicated region
    $region18: #{tpu_custom_call.1} parent=1 // pred_check
      _
    $region19: #{tpu_custom_call.1} parent=1 // pred_check_branch
      %39 = sbr.rel (0) target = $region21
    $region20: #{tpu_custom_call.1} parent=1 // pred_region
      %40 = dma.done [#allocation6], 512
    $region21: #{tpu_custom_call.1} parent=1 // pred_fallthru
      _
    %v41 = vld [vmem:[#allocation2] sm:$0xff]
    %v42 = vld [vmem:[#allocation5] sm:$0xff]
    %v43 = vld [vmem:[#allocation5 + $0x8] sm:$0xff]
    %v44 = vld [vmem:[#allocation5 + $0x10] sm:$0xff]
    %v45 = vld [vmem:[#allocation5 + $0x18] sm:$0xff]
    %v46 = vld [vmem:[%s2] sm:$0x1]
    %v48 = vlaneseq
    %v49 = vshrl.u32 %v48, 7
    %v50 = vsub.s32 0, %v49
    %v51 = vrot.slane %v46, %v50
    %vm53 = vcmask 261120
    %v55 = vsel %vm53, %v41, 0
    %57 = vmatprep.subr.mxu0 0.0
    %58 = vmatpush1.msra.mxu0 0.0
    %59 = vmatprep.subr.mxu0 0.0
    %60 = vmatpush1.msra.mxu0 0.0
    %61 = vmatprep.subr.mxu0 0.0
    %62 = vmatpush1.msra.mxu0 0.0
    %63 = vmatprep.subr.mxu0 0.0
    %64 = vmatpush1.msra.mxu0 0.0
    %65 = vmatprep.subr.mxu0 0.0
    %66 = vmatpush1.msra.mxu0 0.0
    %67 = vmatprep.subr.mxu0 0.0
    %68 = vmatpush1.msra.mxu0 0.0
    %69 = vmatprep.subr.mxu0 0.0
    %70 = vmatpush1.msra.mxu0 0.0
    %71 = vmatprep.subr.mxu0 0.0
    %72 = vmatpush1.msra.mxu0 0.0
    %73 = vmatprep.subr.mxu0 0.0
    %74 = vmatpush1.msra.mxu0 0.0
    %75 = vmatprep.subr.mxu0 0.0
    %76 = vmatpush1.msra.mxu0 0.0
    %77 = vmatprep.subr.mxu0 0.0
    %78 = vmatpush1.msra.mxu0 0.0
    %79 = vmatprep.subr.mxu0 0.0
    %80 = vmatpush1.msra.mxu0 0.0
    %81 = vmatprep.subr.mxu0 0.0
    %82 = vmatpush1.msra.mxu0 %v45
    %83 = vmatprep.subr.mxu0 0.0
    %84 = vmatpush1.msra.mxu0 %v44
    %85 = vmatprep.subr.mxu0 0.0
    %86 = vmatpush1.msra.mxu0 %v43
    %87 = vmatprep.subr.mxu0 0.0
    %88 = vmatpush1.msra.mxu0 %v42
    %89 = vmatprep.subr.mxu0 0.0
    %90 = vmatpush2.msra.mxu0 0.0
    %91 = vmatprep.subr.mxu0 0.0
    %92 = vmatpush2.msra.mxu0 0.0
    %93 = vmatprep.subr.mxu0 0.0
    %94 = vmatpush2.msra.mxu0 0.0
    %95 = vmatprep.subr.mxu0 0.0
    %96 = vmatpush2.msra.mxu0 0.0
    %97 = vmatprep.subr.mxu0 0.0
    %98 = vmatpush2.msra.mxu0 0.0
    %99 = vmatprep.subr.mxu0 0.0
    %100 = vmatpush2.msra.mxu0 0.0
    %101 = vmatprep.subr.mxu0 0.0
    %102 = vmatpush2.msra.mxu0 0.0
    %103 = vmatprep.subr.mxu0 0.0
    %104 = vmatpush2.msra.mxu0 0.0
    %105 = vmatprep.subr.mxu0 0.0
    %106 = vmatpush2.msra.mxu0 0.0
    %107 = vmatprep.subr.mxu0 0.0
    %108 = vmatpush2.msra.mxu0 0.0
    %109 = vmatprep.subr.mxu0 0.0
    %110 = vmatpush2.msra.mxu0 0.0
    %111 = vmatprep.subr.mxu0 0.0
    %112 = vmatpush2.msra.mxu0 0.0
    %113 = vmatprep.subr.mxu0 0.0
    %114 = vmatpush2.msra.mxu0 0.0
    %115 = vmatprep.subr.mxu0 0.0
    %116 = vmatpush2.msra.mxu0 0.0
    %117 = vmatprep.subr.mxu0 0.0
    %118 = vmatpush2.msra.mxu0 0.0
    %119 = vmatprep.subr.mxu0 0.0
    %120 = vmatpush2.msra.mxu0 0.0
    %121 = vmatprep.mubr.f32.mxu0 0.0
    %122 = vmatmul.mubr.f32.gmra.mxu0 %v55
    %v123 = vpop.f32.mrf.mxu0
    %v124 = vadd.f32 %v51, %v123
    %v125 = vpop.f32.mrf.mxu0
    %126 = vdwg.mxu0
    %128 = vrot.lane.b32.xlu0 %v124, 120
    %v129 = vpop.permute.xlu0 %128
    %131 = vrot.lane.b32.xlu0 %v124, 112
    %v132 = vpop.permute.xlu0 %131
    %134 = vrot.lane.b32.xlu0 %v124, 104
    %v135 = vpop.permute.xlu0 %134
    %v137 = vcombine.low %v124, %v132
    %v138 = vcombine.high %v124, %v132
    %v140 = vunpack.c.l.s4 1983009808
    %v141 = vunpack.c.0.s8 %v140
    %v142 = vlaneseq
    %v143 = vshrl.u32 %v142, 7
    %v144 = vsub.s32 %v141, %v143
    %v145 = vrot.slane %v137, %v144
    %v147 = vunpack.c.l.s4 1983009808
    %v148 = vunpack.c.0.s8 %v147
    %v149 = vlaneseq
    %v150 = vshrl.u32 %v149, 7
    %v151 = vsub.s32 %v148, %v150
    %v152 = vrot.slane %v138, %v151
    %v153 = vcombine.low %v129, %v135
    %v154 = vcombine.high %v129, %v135
    %v156 = vunpack.c.l.s4 1983009808
    %v157 = vunpack.c.0.s8 %v156
    %v158 = vlaneseq
    %v159 = vshrl.u32 %v158, 7
    %v160 = vsub.s32 %v157, %v159
    %v161 = vrot.slane %v153, %v160
    %v163 = vunpack.c.l.s4 1983009808
    %v164 = vunpack.c.0.s8 %v163
    %v165 = vlaneseq
    %v166 = vshrl.u32 %v165, 7
    %v167 = vsub.s32 %v164, %v166
    %v168 = vrot.slane %v154, %v167
    %v169 = vcombine.low %v145, %v161
    %v170 = vcombine.high %v145, %v161
    %v172 = vunpack.c.l.s4 1934713408
    %v173 = vunpack.c.0.s8 %v172
    %v174 = vlaneseq
    %v175 = vshrl.u32 %v174, 7
    %v176 = vsub.s32 %v173, %v175
    %v177 = vrot.slane %v169, %v176
    %v179 = vunpack.c.l.s4 1934713408
    %v180 = vunpack.c.0.s8 %v179
    %v181 = vlaneseq
    %v182 = vshrl.u32 %v181, 7
    %v183 = vsub.s32 %v180, %v182
    %v184 = vrot.slane %v170, %v183
    %v185 = vcombine.low %v152, %v168
    %v186 = vcombine.high %v152, %v168
    %v188 = vunpack.c.l.s4 1934713408
    %v189 = vunpack.c.0.s8 %v188
    %v190 = vlaneseq
    %v191 = vshrl.u32 %v190, 7
    %v192 = vsub.s32 %v189, %v191
    %v193 = vrot.slane %v185, %v192
    %v195 = vunpack.c.l.s4 1934713408
    %v196 = vunpack.c.0.s8 %v195
    %v197 = vlaneseq
    %v198 = vshrl.u32 %v197, 7
    %v199 = vsub.s32 %v196, %v198
    %v200 = vrot.slane %v186, %v199
    %v201 = vcombine.high %v177, 0.0
    %v202 = vcombine.high %v184, 0.0
    %v203 = vcombine.high %v193, 0.0
    %v204 = vcombine.high %v200, 0.0
    %v205 = vcombine.low %v177, %v184
    %v207 = vunpack.c.l.s4 1983009808
    %v208 = vunpack.c.0.s8 %v207
    %v209 = vlaneseq
    %v210 = vshrl.u32 %v209, 7
    %v211 = vsub.s32 %v208, %v210
    %v212 = vrot.slane %v205, %v211
    %v213 = vcombine.low %v201, %v202
    %v215 = vunpack.c.l.s4 1983009808
    %v216 = vunpack.c.0.s8 %v215
    %v217 = vlaneseq
    %v218 = vshrl.u32 %v217, 7
    %v219 = vsub.s32 %v216, %v218
    %v220 = vrot.slane %v213, %v219
    %v221 = vcombine.low %v193, %v200
    %v223 = vunpack.c.l.s4 1983009808
    %v224 = vunpack.c.0.s8 %v223
    %v225 = vlaneseq
    %v226 = vshrl.u32 %v225, 7
    %v227 = vsub.s32 %v224, %v226
    %v228 = vrot.slane %v221, %v227
    %v229 = vcombine.low %v203, %v204
    %v231 = vunpack.c.l.s4 1983009808
    %v232 = vunpack.c.0.s8 %v231
    %v233 = vlaneseq
    %v234 = vshrl.u32 %v233, 7
    %v235 = vsub.s32 %v232, %v234
    %v236 = vrot.slane %v229, %v235
    %v237 = vcombine.low %v212, %v220
    %v238 = vcombine.high %v212, %v220
    %v240 = vunpack.c.l.s4 1934713408
    %v241 = vunpack.c.0.s8 %v240
    %v242 = vlaneseq
    %v243 = vshrl.u32 %v242, 7
    %v244 = vsub.s32 %v241, %v243
    %v245 = vrot.slane %v237, %v244
    %v247 = vunpack.c.l.s4 1934713408
    %v248 = vunpack.c.0.s8 %v247
    %v249 = vlaneseq
    %v250 = vshrl.u32 %v249, 7
    %v251 = vsub.s32 %v248, %v250
    %v252 = vrot.slane %v238, %v251
    %v253 = vcombine.low %v228, %v236
    %v254 = vcombine.high %v228, %v236
    %v256 = vunpack.c.l.s4 1934713408
    %v257 = vunpack.c.0.s8 %v256
    %v258 = vlaneseq
    %v259 = vshrl.u32 %v258, 7
    %v260 = vsub.s32 %v257, %v259
    %v261 = vrot.slane %v253, %v260
    %v263 = vunpack.c.l.s4 1934713408
    %v264 = vunpack.c.0.s8 %v263
    %v265 = vlaneseq
    %v266 = vshrl.u32 %v265, 7
    %v267 = vsub.s32 %v264, %v266
    %v268 = vrot.slane %v254, %v267
    %v269 = vcombine.low %v245, %v261
    %v270 = vcombine.high %v245, %v261
    %v271 = vcombine.low %v252, %v268
    %v272 = vcombine.high %v252, %v268
    %273 = vrot.lane.b32.xlu0 %v124, 96
    %v274 = vpop.permute.xlu0 %273
    %275 = vrot.lane.b32.xlu0 %v129, 96
    %v276 = vpop.permute.xlu0 %275
    %277 = vrot.lane.b32.xlu0 %v132, 96
    %v278 = vpop.permute.xlu0 %277
    %279 = vrot.lane.b32.xlu0 %v135, 96
    %v280 = vpop.permute.xlu0 %279
    %v285 = vcombine.low %v274, %v278
    %v286 = vcombine.high %v274, %v278
    %v288 = vunpack.c.l.s4 1983009808
    %v289 = vunpack.c.0.s8 %v288
    %v290 = vlaneseq
    %v291 = vshrl.u32 %v290, 7
    %v292 = vsub.s32 %v289, %v291
    %v293 = vrot.slane %v285, %v292
    %v295 = vunpack.c.l.s4 1983009808
    %v296 = vunpack.c.0.s8 %v295
    %v297 = vlaneseq
    %v298 = vshrl.u32 %v297, 7
    %v299 = vsub.s32 %v296, %v298
    %v300 = vrot.slane %v286, %v299
    %v301 = vcombine.low %v276, %v280
    %v302 = vcombine.high %v276, %v280
    %v304 = vunpack.c.l.s4 1983009808
    %v305 = vunpack.c.0.s8 %v304
    %v306 = vlaneseq
    %v307 = vshrl.u32 %v306, 7
    %v308 = vsub.s32 %v305, %v307
    %v309 = vrot.slane %v301, %v308
    %v311 = vunpack.c.l.s4 1983009808
    %v312 = vunpack.c.0.s8 %v311
    %v313 = vlaneseq
    %v314 = vshrl.u32 %v313, 7
    %v315 = vsub.s32 %v312, %v314
    %v316 = vrot.slane %v302, %v315
    %v317 = vcombine.low %v293, %v309
    %v318 = vcombine.high %v293, %v309
    %v320 = vunpack.c.l.s4 1934713408
    %v321 = vunpack.c.0.s8 %v320
    %v322 = vlaneseq
    %v323 = vshrl.u32 %v322, 7
    %v324 = vsub.s32 %v321, %v323
    %v325 = vrot.slane %v317, %v324
    %v327 = vunpack.c.l.s4 1934713408
    %v328 = vunpack.c.0.s8 %v327
    %v329 = vlaneseq
    %v330 = vshrl.u32 %v329, 7
    %v331 = vsub.s32 %v328, %v330
    %v332 = vrot.slane %v318, %v331
    %v333 = vcombine.low %v300, %v316
    %v334 = vcombine.high %v300, %v316
    %v336 = vunpack.c.l.s4 1934713408
    %v337 = vunpack.c.0.s8 %v336
    %v338 = vlaneseq
    %v339 = vshrl.u32 %v338, 7
    %v340 = vsub.s32 %v337, %v339
    %v341 = vrot.slane %v333, %v340
    %v343 = vunpack.c.l.s4 1934713408
    %v344 = vunpack.c.0.s8 %v343
    %v345 = vlaneseq
    %v346 = vshrl.u32 %v345, 7
    %v347 = vsub.s32 %v344, %v346
    %v348 = vrot.slane %v334, %v347
    %v349 = vcombine.high %v325, 0.0
    %v350 = vcombine.high %v332, 0.0
    %v351 = vcombine.high %v341, 0.0
    %v352 = vcombine.high %v348, 0.0
    %v353 = vcombine.low %v325, %v332
    %v355 = vunpack.c.l.s4 1983009808
    %v356 = vunpack.c.0.s8 %v355
    %v357 = vlaneseq
    %v358 = vshrl.u32 %v357, 7
    %v359 = vsub.s32 %v356, %v358
    %v360 = vrot.slane %v353, %v359
    %v361 = vcombine.low %v349, %v350
    %v363 = vunpack.c.l.s4 1983009808
    %v364 = vunpack.c.0.s8 %v363
    %v365 = vlaneseq
    %v366 = vshrl.u32 %v365, 7
    %v367 = vsub.s32 %v364, %v366
    %v368 = vrot.slane %v361, %v367
    %v369 = vcombine.low %v341, %v348
    %v371 = vunpack.c.l.s4 1983009808
    %v372 = vunpack.c.0.s8 %v371
    %v373 = vlaneseq
    %v374 = vshrl.u32 %v373, 7
    %v375 = vsub.s32 %v372, %v374
    %v376 = vrot.slane %v369, %v375
    %v377 = vcombine.low %v351, %v352
    %v379 = vunpack.c.l.s4 1983009808
    %v380 = vunpack.c.0.s8 %v379
    %v381 = vlaneseq
    %v382 = vshrl.u32 %v381, 7
    %v383 = vsub.s32 %v380, %v382
    %v384 = vrot.slane %v377, %v383
    %v385 = vcombine.low %v360, %v368
    %v386 = vcombine.high %v360, %v368
    %v388 = vunpack.c.l.s4 1934713408
    %v389 = vunpack.c.0.s8 %v388
    %v390 = vlaneseq
    %v391 = vshrl.u32 %v390, 7
    %v392 = vsub.s32 %v389, %v391
    %v393 = vrot.slane %v385, %v392
    %v395 = vunpack.c.l.s4 1934713408
    %v396 = vunpack.c.0.s8 %v395
    %v397 = vlaneseq
    %v398 = vshrl.u32 %v397, 7
    %v399 = vsub.s32 %v396, %v398
    %v400 = vrot.slane %v386, %v399
    %v401 = vcombine.low %v376, %v384
    %v402 = vcombine.high %v376, %v384
    %v404 = vunpack.c.l.s4 1934713408
    %v405 = vunpack.c.0.s8 %v404
    %v406 = vlaneseq
    %v407 = vshrl.u32 %v406, 7
    %v408 = vsub.s32 %v405, %v407
    %v409 = vrot.slane %v401, %v408
    %v411 = vunpack.c.l.s4 1934713408
    %v412 = vunpack.c.0.s8 %v411
    %v413 = vlaneseq
    %v414 = vshrl.u32 %v413, 7
    %v415 = vsub.s32 %v412, %v414
    %v416 = vrot.slane %v402, %v415
    %v417 = vcombine.low %v393, %v409
    %v418 = vcombine.high %v393, %v409
    %v419 = vcombine.low %v400, %v416
    %v420 = vcombine.high %v400, %v416
    %421 = vrot.lane.b32.xlu0 %v124, 64
    %v422 = vpop.permute.xlu0 %421
    %423 = vrot.lane.b32.xlu0 %v129, 64
    %v424 = vpop.permute.xlu0 %423
    %425 = vrot.lane.b32.xlu0 %v132, 64
    %v426 = vpop.permute.xlu0 %425
    %427 = vrot.lane.b32.xlu0 %v135, 64
    %v428 = vpop.permute.xlu0 %427
    %v433 = vcombine.low %v422, %v426
    %v434 = vcombine.high %v422, %v426
    %v436 = vunpack.c.l.s4 1983009808
    %v437 = vunpack.c.0.s8 %v436
    %v438 = vlaneseq
    %v439 = vshrl.u32 %v438, 7
    %v440 = vsub.s32 %v437, %v439
    %v441 = vrot.slane %v433, %v440
    %v443 = vunpack.c.l.s4 1983009808
    %v444 = vunpack.c.0.s8 %v443
    %v445 = vlaneseq
    %v446 = vshrl.u32 %v445, 7
    %v447 = vsub.s32 %v444, %v446
    %v448 = vrot.slane %v434, %v447
    %v449 = vcombine.low %v424, %v428
    %v450 = vcombine.high %v424, %v428
    %v452 = vunpack.c.l.s4 1983009808
    %v453 = vunpack.c.0.s8 %v452
    %v454 = vlaneseq
    %v455 = vshrl.u32 %v454, 7
    %v456 = vsub.s32 %v453, %v455
    %v457 = vrot.slane %v449, %v456
    %v459 = vunpack.c.l.s4 1983009808
    %v460 = vunpack.c.0.s8 %v459
    %v461 = vlaneseq
    %v462 = vshrl.u32 %v461, 7
    %v463 = vsub.s32 %v460, %v462
    %v464 = vrot.slane %v450, %v463
    %v465 = vcombine.low %v441, %v457
    %v466 = vcombine.high %v441, %v457
    %v468 = vunpack.c.l.s4 1934713408
    %v469 = vunpack.c.0.s8 %v468
    %v470 = vlaneseq
    %v471 = vshrl.u32 %v470, 7
    %v472 = vsub.s32 %v469, %v471
    %v473 = vrot.slane %v465, %v472
    %v475 = vunpack.c.l.s4 1934713408
    %v476 = vunpack.c.0.s8 %v475
    %v477 = vlaneseq
    %v478 = vshrl.u32 %v477, 7
    %v479 = vsub.s32 %v476, %v478
    %v480 = vrot.slane %v466, %v479
    %v481 = vcombine.low %v448, %v464
    %v482 = vcombine.high %v448, %v464
    %v484 = vunpack.c.l.s4 1934713408
    %v485 = vunpack.c.0.s8 %v484
    %v486 = vlaneseq
    %v487 = vshrl.u32 %v486, 7
    %v488 = vsub.s32 %v485, %v487
    %v489 = vrot.slane %v481, %v488
    %v491 = vunpack.c.l.s4 1934713408
    %v492 = vunpack.c.0.s8 %v491
    %v493 = vlaneseq
    %v494 = vshrl.u32 %v493, 7
    %v495 = vsub.s32 %v492, %v494
    %v496 = vrot.slane %v482, %v495
    %v497 = vcombine.high %v473, 0.0
    %v498 = vcombine.high %v480, 0.0
    %v499 = vcombine.high %v489, 0.0
    %v500 = vcombine.high %v496, 0.0
    %v501 = vcombine.low %v473, %v480
    %v503 = vunpack.c.l.s4 1983009808
    %v504 = vunpack.c.0.s8 %v503
    %v505 = vlaneseq
    %v506 = vshrl.u32 %v505, 7
    %v507 = vsub.s32 %v504, %v506
    %v508 = vrot.slane %v501, %v507
    %v509 = vcombine.low %v497, %v498
    %v511 = vunpack.c.l.s4 1983009808
    %v512 = vunpack.c.0.s8 %v511
    %v513 = vlaneseq
    %v514 = vshrl.u32 %v513, 7
    %v515 = vsub.s32 %v512, %v514
    %v516 = vrot.slane %v509, %v515
    %v517 = vcombine.low %v489, %v496
    %v519 = vunpack.c.l.s4 1983009808
    %v520 = vunpack.c.0.s8 %v519
    %v521 = vlaneseq
    %v522 = vshrl.u32 %v521, 7
    %v523 = vsub.s32 %v520, %v522
    %v524 = vrot.slane %v517, %v523
    %v525 = vcombine.low %v499, %v500
    %v527 = vunpack.c.l.s4 1983009808
    %v528 = vunpack.c.0.s8 %v527
    %v529 = vlaneseq
    %v530 = vshrl.u32 %v529, 7
    %v531 = vsub.s32 %v528, %v530
    %v532 = vrot.slane %v525, %v531
    %v533 = vcombine.low %v508, %v516
    %v534 = vcombine.high %v508, %v516
    %v536 = vunpack.c.l.s4 1934713408
    %v537 = vunpack.c.0.s8 %v536
    %v538 = vlaneseq
    %v539 = vshrl.u32 %v538, 7
    %v540 = vsub.s32 %v537, %v539
    %v541 = vrot.slane %v533, %v540
    %v543 = vunpack.c.l.s4 1934713408
    %v544 = vunpack.c.0.s8 %v543
    %v545 = vlaneseq
    %v546 = vshrl.u32 %v545, 7
    %v547 = vsub.s32 %v544, %v546
    %v548 = vrot.slane %v534, %v547
    %v549 = vcombine.low %v524, %v532
    %v550 = vcombine.high %v524, %v532
    %v552 = vunpack.c.l.s4 1934713408
    %v553 = vunpack.c.0.s8 %v552
    %v554 = vlaneseq
    %v555 = vshrl.u32 %v554, 7
    %v556 = vsub.s32 %v553, %v555
    %v557 = vrot.slane %v549, %v556
    %v559 = vunpack.c.l.s4 1934713408
    %v560 = vunpack.c.0.s8 %v559
    %v561 = vlaneseq
    %v562 = vshrl.u32 %v561, 7
    %v563 = vsub.s32 %v560, %v562
    %v564 = vrot.slane %v550, %v563
    %v565 = vcombine.low %v541, %v557
    %v566 = vcombine.high %v541, %v557
    %v567 = vcombine.low %v548, %v564
    %v568 = vcombine.high %v548, %v564
    %vm569 = vcmask 64512
    %v571 = vsel %vm569, %v269, 0
    %v574 = vsel %vm569, %v417, 0
    %576 = vmatprep.subr.mxu0 0.0
    %577 = vmatpush1.xpose.msra.mxu0 0.0
    %578 = vmatprep.subr.mxu0 0.0
    %579 = vmatpush1.xpose.msra.mxu0 0.0
    %580 = vmatprep.subr.mxu0 0.0
    %581 = vmatpush1.xpose.msra.mxu0 0.0
    %582 = vmatprep.subr.mxu0 0.0
    %583 = vmatpush1.xpose.msra.mxu0 0.0
    %584 = vmatprep.subr.mxu0 0.0
    %585 = vmatpush1.xpose.msra.mxu0 0.0
    %586 = vmatprep.subr.mxu0 0.0
    %587 = vmatpush1.xpose.msra.mxu0 0.0
    %588 = vmatprep.subr.mxu0 0.0
    %589 = vmatpush1.xpose.msra.mxu0 0.0
    %590 = vmatprep.subr.mxu0 0.0
    %591 = vmatpush1.xpose.msra.mxu0 0.0
    %592 = vmatprep.subr.mxu0 0.0
    %593 = vmatpush1.xpose.msra.mxu0 0.0
    %594 = vmatprep.subr.mxu0 0.0
    %595 = vmatpush1.xpose.msra.mxu0 0.0
    %596 = vmatprep.subr.mxu0 0.0
    %597 = vmatpush1.xpose.msra.mxu0 0.0
    %598 = vmatprep.subr.mxu0 0.0
    %599 = vmatpush1.xpose.msra.mxu0 0.0
    %600 = vmatprep.subr.mxu0 0.0
    %601 = vmatpush1.xpose.msra.mxu0 0.0
    %602 = vmatprep.subr.mxu0 0.0
    %603 = vmatpush1.xpose.msra.mxu0 0.0
    %604 = vmatprep.subr.mxu0 0.0
    %605 = vmatpush1.xpose.msra.mxu0 0.0
    %606 = vmatprep.subr.mxu0 0.0
    %607 = vmatpush1.xpose.msra.mxu0 %v574
    %608 = vmatprep.subr.mxu0 0.0
    %609 = vmatpush2.xpose.msra.mxu0 0.0
    %610 = vmatprep.subr.mxu0 0.0
    %611 = vmatpush2.xpose.msra.mxu0 0.0
    %612 = vmatprep.subr.mxu0 0.0
    %613 = vmatpush2.xpose.msra.mxu0 0.0
    %614 = vmatprep.subr.mxu0 0.0
    %615 = vmatpush2.xpose.msra.mxu0 0.0
    %616 = vmatprep.subr.mxu0 0.0
    %617 = vmatpush2.xpose.msra.mxu0 0.0
    %618 = vmatprep.subr.mxu0 0.0
    %619 = vmatpush2.xpose.msra.mxu0 0.0
    %620 = vmatprep.subr.mxu0 0.0
    %621 = vmatpush2.xpose.msra.mxu0 0.0
    %622 = vmatprep.subr.mxu0 0.0
    %623 = vmatpush2.xpose.msra.mxu0 0.0
    %624 = vmatprep.subr.mxu0 0.0
    %625 = vmatpush2.xpose.msra.mxu0 0.0
    %626 = vmatprep.subr.mxu0 0.0
    %627 = vmatpush2.xpose.msra.mxu0 0.0
    %628 = vmatprep.subr.mxu0 0.0
    %629 = vmatpush2.xpose.msra.mxu0 0.0
    %630 = vmatprep.subr.mxu0 0.0
    %631 = vmatpush2.xpose.msra.mxu0 0.0
    %632 = vmatprep.subr.mxu0 0.0
    %633 = vmatpush2.xpose.msra.mxu0 0.0
    %634 = vmatprep.subr.mxu0 0.0
    %635 = vmatpush2.xpose.msra.mxu0 0.0
    %636 = vmatprep.subr.mxu0 0.0
    %637 = vmatpush2.xpose.msra.mxu0 0.0
    %638 = vmatprep.subr.mxu0 0.0
    %639 = vmatpush2.xpose.msra.mxu0 0.0
    %640 = vmatprep.mubr.f32.mxu0 0.0
    %641 = vmatmul.mubr.f32.gmra.mxu0 %v571
    %v642 = vpop.f32.mrf.mxu0
    %v643 = vadd.f32 0.0, %v642
    %v644 = vpop.f32.mrf.mxu0
    %645 = vdwg.mxu0
    %v647 = vsel %vm569, %v270, 0
    %v650 = vsel %vm569, %v418, 0
    %652 = vmatprep.subr.mxu0 0.0
    %653 = vmatpush1.xpose.msra.mxu0 0.0
    %654 = vmatprep.subr.mxu0 0.0
    %655 = vmatpush1.xpose.msra.mxu0 0.0
    %656 = vmatprep.subr.mxu0 0.0
    %657 = vmatpush1.xpose.msra.mxu0 0.0
    %658 = vmatprep.subr.mxu0 0.0
    %659 = vmatpush1.xpose.msra.mxu0 0.0
    %660 = vmatprep.subr.mxu0 0.0
    %661 = vmatpush1.xpose.msra.mxu0 0.0
    %662 = vmatprep.subr.mxu0 0.0
    %663 = vmatpush1.xpose.msra.mxu0 0.0
    %664 = vmatprep.subr.mxu0 0.0
    %665 = vmatpush1.xpose.msra.mxu0 0.0
    %666 = vmatprep.subr.mxu0 0.0
    %667 = vmatpush1.xpose.msra.mxu0 0.0
    %668 = vmatprep.subr.mxu0 0.0
    %669 = vmatpush1.xpose.msra.mxu0 0.0
    %670 = vmatprep.subr.mxu0 0.0
    %671 = vmatpush1.xpose.msra.mxu0 0.0
    %672 = vmatprep.subr.mxu0 0.0
    %673 = vmatpush1.xpose.msra.mxu0 0.0
    %674 = vmatprep.subr.mxu0 0.0
    %675 = vmatpush1.xpose.msra.mxu0 0.0
    %676 = vmatprep.subr.mxu0 0.0
    %677 = vmatpush1.xpose.msra.mxu0 0.0
    %678 = vmatprep.subr.mxu0 0.0
    %679 = vmatpush1.xpose.msra.mxu0 0.0
    %680 = vmatprep.subr.mxu0 0.0
    %681 = vmatpush1.xpose.msra.mxu0 0.0
    %682 = vmatprep.subr.mxu0 0.0
    %683 = vmatpush1.xpose.msra.mxu0 %v650
    %684 = vmatprep.subr.mxu0 0.0
    %685 = vmatpush2.xpose.msra.mxu0 0.0
    %686 = vmatprep.subr.mxu0 0.0
    %687 = vmatpush2.xpose.msra.mxu0 0.0
    %688 = vmatprep.subr.mxu0 0.0
    %689 = vmatpush2.xpose.msra.mxu0 0.0
    %690 = vmatprep.subr.mxu0 0.0
    %691 = vmatpush2.xpose.msra.mxu0 0.0
    %692 = vmatprep.subr.mxu0 0.0
    %693 = vmatpush2.xpose.msra.mxu0 0.0
    %694 = vmatprep.subr.mxu0 0.0
    %695 = vmatpush2.xpose.msra.mxu0 0.0
    %696 = vmatprep.subr.mxu0 0.0
    %697 = vmatpush2.xpose.msra.mxu0 0.0
    %698 = vmatprep.subr.mxu0 0.0
    %699 = vmatpush2.xpose.msra.mxu0 0.0
    %700 = vmatprep.subr.mxu0 0.0
    %701 = vmatpush2.xpose.msra.mxu0 0.0
    %702 = vmatprep.subr.mxu0 0.0
    %703 = vmatpush2.xpose.msra.mxu0 0.0
    %704 = vmatprep.subr.mxu0 0.0
    %705 = vmatpush2.xpose.msra.mxu0 0.0
    %706 = vmatprep.subr.mxu0 0.0
    %707 = vmatpush2.xpose.msra.mxu0 0.0
    %708 = vmatprep.subr.mxu0 0.0
    %709 = vmatpush2.xpose.msra.mxu0 0.0
    %710 = vmatprep.subr.mxu0 0.0
    %711 = vmatpush2.xpose.msra.mxu0 0.0
    %712 = vmatprep.subr.mxu0 0.0
    %713 = vmatpush2.xpose.msra.mxu0 0.0
    %714 = vmatprep.subr.mxu0 0.0
    %715 = vmatpush2.xpose.msra.mxu0 0.0
    %716 = vmatprep.mubr.f32.mxu0 0.0
    %717 = vmatmul.mubr.f32.gmra.mxu0 %v647
    %v718 = vpop.f32.mrf.mxu0
    %v719 = vadd.f32 0.0, %v718
    %v720 = vpop.f32.mrf.mxu0
    %721 = vdwg.mxu0
    %v723 = vsel %vm569, %v271, 0
    %v726 = vsel %vm569, %v419, 0
    %728 = vmatprep.subr.mxu0 0.0
    %729 = vmatpush1.xpose.msra.mxu0 0.0
    %730 = vmatprep.subr.mxu0 0.0
    %731 = vmatpush1.xpose.msra.mxu0 0.0
    %732 = vmatprep.subr.mxu0 0.0
    %733 = vmatpush1.xpose.msra.mxu0 0.0
    %734 = vmatprep.subr.mxu0 0.0
    %735 = vmatpush1.xpose.msra.mxu0 0.0
    %736 = vmatprep.subr.mxu0 0.0
    %737 = vmatpush1.xpose.msra.mxu0 0.0
    %738 = vmatprep.subr.mxu0 0.0
    %739 = vmatpush1.xpose.msra.mxu0 0.0
    %740 = vmatprep.subr.mxu0 0.0
    %741 = vmatpush1.xpose.msra.mxu0 0.0
    %742 = vmatprep.subr.mxu0 0.0
    %743 = vmatpush1.xpose.msra.mxu0 0.0
    %744 = vmatprep.subr.mxu0 0.0
    %745 = vmatpush1.xpose.msra.mxu0 0.0
    %746 = vmatprep.subr.mxu0 0.0
    %747 = vmatpush1.xpose.msra.mxu0 0.0
    %748 = vmatprep.subr.mxu0 0.0
    %749 = vmatpush1.xpose.msra.mxu0 0.0
    %750 = vmatprep.subr.mxu0 0.0
    %751 = vmatpush1.xpose.msra.mxu0 0.0
    %752 = vmatprep.subr.mxu0 0.0
    %753 = vmatpush1.xpose.msra.mxu0 0.0
    %754 = vmatprep.subr.mxu0 0.0
    %755 = vmatpush1.xpose.msra.mxu0 0.0
    %756 = vmatprep.subr.mxu0 0.0
    %757 = vmatpush1.xpose.msra.mxu0 0.0
    %758 = vmatprep.subr.mxu0 0.0
    %759 = vmatpush1.xpose.msra.mxu0 %v726
    %760 = vmatprep.subr.mxu0 0.0
    %761 = vmatpush2.xpose.msra.mxu0 0.0
    %762 = vmatprep.subr.mxu0 0.0
    %763 = vmatpush2.xpose.msra.mxu0 0.0
    %764 = vmatprep.subr.mxu0 0.0
    %765 = vmatpush2.xpose.msra.mxu0 0.0
    %766 = vmatprep.subr.mxu0 0.0
    %767 = vmatpush2.xpose.msra.mxu0 0.0
    %768 = vmatprep.subr.mxu0 0.0
    %769 = vmatpush2.xpose.msra.mxu0 0.0
    %770 = vmatprep.subr.mxu0 0.0
    %771 = vmatpush2.xpose.msra.mxu0 0.0
    %772 = vmatprep.subr.mxu0 0.0
    %773 = vmatpush2.xpose.msra.mxu0 0.0
    %774 = vmatprep.subr.mxu0 0.0
    %775 = vmatpush2.xpose.msra.mxu0 0.0
    %776 = vmatprep.subr.mxu0 0.0
    %777 = vmatpush2.xpose.msra.mxu0 0.0
    %778 = vmatprep.subr.mxu0 0.0
    %779 = vmatpush2.xpose.msra.mxu0 0.0
    %780 = vmatprep.subr.mxu0 0.0
    %781 = vmatpush2.xpose.msra.mxu0 0.0
    %782 = vmatprep.subr.mxu0 0.0
    %783 = vmatpush2.xpose.msra.mxu0 0.0
    %784 = vmatprep.subr.mxu0 0.0
    %785 = vmatpush2.xpose.msra.mxu0 0.0
    %786 = vmatprep.subr.mxu0 0.0
    %787 = vmatpush2.xpose.msra.mxu0 0.0
    %788 = vmatprep.subr.mxu0 0.0
    %789 = vmatpush2.xpose.msra.mxu0 0.0
    %790 = vmatprep.subr.mxu0 0.0
    %791 = vmatpush2.xpose.msra.mxu0 0.0
    %792 = vmatprep.mubr.f32.mxu0 0.0
    %793 = vmatmul.mubr.f32.gmra.mxu0 %v723
    %v794 = vpop.f32.mrf.mxu0
    %v795 = vadd.f32 0.0, %v794
    %v796 = vpop.f32.mrf.mxu0
    %797 = vdwg.mxu0
    %v799 = vsel %vm569, %v272, 0
    %v802 = vsel %vm569, %v420, 0
    %804 = vmatprep.subr.mxu0 0.0
    %805 = vmatpush1.xpose.msra.mxu0 0.0
    %806 = vmatprep.subr.mxu0 0.0
    %807 = vmatpush1.xpose.msra.mxu0 0.0
    %808 = vmatprep.subr.mxu0 0.0
    %809 = vmatpush1.xpose.msra.mxu0 0.0
    %810 = vmatprep.subr.mxu0 0.0
    %811 = vmatpush1.xpose.msra.mxu0 0.0
    %812 = vmatprep.subr.mxu0 0.0
    %813 = vmatpush1.xpose.msra.mxu0 0.0
    %814 = vmatprep.subr.mxu0 0.0
    %815 = vmatpush1.xpose.msra.mxu0 0.0
    %816 = vmatprep.subr.mxu0 0.0
    %817 = vmatpush1.xpose.msra.mxu0 0.0
    %818 = vmatprep.subr.mxu0 0.0
    %819 = vmatpush1.xpose.msra.mxu0 0.0
    %820 = vmatprep.subr.mxu0 0.0
    %821 = vmatpush1.xpose.msra.mxu0 0.0
    %822 = vmatprep.subr.mxu0 0.0
    %823 = vmatpush1.xpose.msra.mxu0 0.0
    %824 = vmatprep.subr.mxu0 0.0
    %825 = vmatpush1.xpose.msra.mxu0 0.0
    %826 = vmatprep.subr.mxu0 0.0
    %827 = vmatpush1.xpose.msra.mxu0 0.0
    %828 = vmatprep.subr.mxu0 0.0
    %829 = vmatpush1.xpose.msra.mxu0 0.0
    %830 = vmatprep.subr.mxu0 0.0
    %831 = vmatpush1.xpose.msra.mxu0 0.0
    %832 = vmatprep.subr.mxu0 0.0
    %833 = vmatpush1.xpose.msra.mxu0 0.0
    %834 = vmatprep.subr.mxu0 0.0
    %835 = vmatpush1.xpose.msra.mxu0 %v802
    %836 = vmatprep.subr.mxu0 0.0
    %837 = vmatpush2.xpose.msra.mxu0 0.0
    %838 = vmatprep.subr.mxu0 0.0
    %839 = vmatpush2.xpose.msra.mxu0 0.0
    %840 = vmatprep.subr.mxu0 0.0
    %841 = vmatpush2.xpose.msra.mxu0 0.0
    %842 = vmatprep.subr.mxu0 0.0
    %843 = vmatpush2.xpose.msra.mxu0 0.0
    %844 = vmatprep.subr.mxu0 0.0
    %845 = vmatpush2.xpose.msra.mxu0 0.0
    %846 = vmatprep.subr.mxu0 0.0
    %847 = vmatpush2.xpose.msra.mxu0 0.0
    %848 = vmatprep.subr.mxu0 0.0
    %849 = vmatpush2.xpose.msra.mxu0 0.0
    %850 = vmatprep.subr.mxu0 0.0
    %851 = vmatpush2.xpose.msra.mxu0 0.0
    %852 = vmatprep.subr.mxu0 0.0
    %853 = vmatpush2.xpose.msra.mxu0 0.0
    %854 = vmatprep.subr.mxu0 0.0
    %855 = vmatpush2.xpose.msra.mxu0 0.0
    %856 = vmatprep.subr.mxu0 0.0
    %857 = vmatpush2.xpose.msra.mxu0 0.0
    %858 = vmatprep.subr.mxu0 0.0
    %859 = vmatpush2.xpose.msra.mxu0 0.0
    %860 = vmatprep.subr.mxu0 0.0
    %861 = vmatpush2.xpose.msra.mxu0 0.0
    %862 = vmatprep.subr.mxu0 0.0
    %863 = vmatpush2.xpose.msra.mxu0 0.0
    %864 = vmatprep.subr.mxu0 0.0
    %865 = vmatpush2.xpose.msra.mxu0 0.0
    %866 = vmatprep.subr.mxu0 0.0
    %867 = vmatpush2.xpose.msra.mxu0 0.0
    %868 = vmatprep.mubr.f32.mxu0 0.0
    %869 = vmatmul.mubr.f32.gmra.mxu0 %v799
    %v870 = vpop.f32.mrf.mxu0
    %v871 = vadd.f32 0.0, %v870
    %v872 = vpop.f32.mrf.mxu0
    %873 = vdwg.mxu0
    %v874 = vsel %vm569, %v643, -inf
    %875 = vmax.xlane.f32.xlu0 %v874
    %v876 = vpop.xlane.xlu0 %875
    %v877 = vsel %vm569, %v719, -inf
    %878 = vmax.xlane.f32.xlu0 %v877
    %v879 = vpop.xlane.xlu0 %878
    %v880 = vsel %vm569, %v795, -inf
    %881 = vmax.xlane.f32.xlu0 %v880
    %v882 = vpop.xlane.xlu0 %881
    %v883 = vsel %vm569, %v871, -inf
    %884 = vmax.xlane.f32.xlu0 %v883
    %v885 = vpop.xlane.xlu0 %884
    %v886 = vsub.f32 %v643, %v876
    %v887 = vsub.f32 %v719, %v879
    %v888 = vsub.f32 %v795, %v882
    %v889 = vsub.f32 %v871, %v885
    %v890 = vmul.f32 %v886, 1.442695
    %v891 = vpow.pop %v890
    %v892 = vmul.f32 %v887, 1.442695
    %v893 = vpow.pop %v892
    %v894 = vmul.f32 %v888, 1.442695
    %v895 = vpow.pop %v894
    %v896 = vmul.f32 %v889, 1.442695
    %v897 = vpow.pop %v896
    %v898 = vsel %vm569, %v891, 0.0
    %899 = vadd.xlane.f32.xlu0 %v898
    %v900 = vpop.xlane.xlu0 %899
    %v901 = vsel %vm569, %v893, 0.0
    %902 = vadd.xlane.f32.xlu0 %v901
    %v903 = vpop.xlane.xlu0 %902
    %v904 = vsel %vm569, %v895, 0.0
    %905 = vadd.xlane.f32.xlu0 %v904
    %v906 = vpop.xlane.xlu0 %905
    %v907 = vsel %vm569, %v897, 0.0
    %908 = vadd.xlane.f32.xlu0 %v907
    %v909 = vpop.xlane.xlu0 %908
    %v910 = vrcp.pop %v900
    %v911 = vmul.f32 %v891, %v910
    %v912 = vrcp.pop %v903
    %v913 = vmul.f32 %v893, %v912
    %v914 = vrcp.pop %v906
    %v915 = vmul.f32 %v895, %v914
    %v916 = vrcp.pop %v909
    %v917 = vmul.f32 %v897, %v916
    %v919 = vsel %vm569, %v911, 0
    %921 = vmatprep.subr.mxu0 0.0
    %922 = vmatpush1.msra.mxu0 0.0
    %923 = vmatprep.subr.mxu0 0.0
    %924 = vmatpush1.msra.mxu0 0.0
    %925 = vmatprep.subr.mxu0 0.0
    %926 = vmatpush1.msra.mxu0 0.0
    %927 = vmatprep.subr.mxu0 0.0
    %928 = vmatpush1.msra.mxu0 0.0
    %929 = vmatprep.subr.mxu0 0.0
    %930 = vmatpush1.msra.mxu0 0.0
    %931 = vmatprep.subr.mxu0 0.0
    %932 = vmatpush1.msra.mxu0 0.0
    %933 = vmatprep.subr.mxu0 0.0
    %934 = vmatpush1.msra.mxu0 0.0
    %935 = vmatprep.subr.mxu0 0.0
    %936 = vmatpush1.msra.mxu0 0.0
    %937 = vmatprep.subr.mxu0 0.0
    %938 = vmatpush1.msra.mxu0 0.0
    %939 = vmatprep.subr.mxu0 0.0
    %940 = vmatpush1.msra.mxu0 0.0
    %941 = vmatprep.subr.mxu0 0.0
    %942 = vmatpush1.msra.mxu0 0.0
    %943 = vmatprep.subr.mxu0 0.0
    %944 = vmatpush1.msra.mxu0 0.0
    %945 = vmatprep.subr.mxu0 0.0
    %946 = vmatpush1.msra.mxu0 0.0
    %947 = vmatprep.subr.mxu0 0.0
    %948 = vmatpush1.msra.mxu0 0.0
    %949 = vmatprep.subr.mxu0 0.0
    %950 = vmatpush1.msra.mxu0 0.0
    %951 = vmatprep.subr.mxu0 0.0
    %952 = vmatpush1.msra.mxu0 %v565
    %953 = vmatprep.subr.mxu0 0.0
    %954 = vmatpush2.msra.mxu0 0.0
    %955 = vmatprep.subr.mxu0 0.0
    %956 = vmatpush2.msra.mxu0 0.0
    %957 = vmatprep.subr.mxu0 0.0
    %958 = vmatpush2.msra.mxu0 0.0
    %959 = vmatprep.subr.mxu0 0.0
    %960 = vmatpush2.msra.mxu0 0.0
    %961 = vmatprep.subr.mxu0 0.0
    %962 = vmatpush2.msra.mxu0 0.0
    %963 = vmatprep.subr.mxu0 0.0
    %964 = vmatpush2.msra.mxu0 0.0
    %965 = vmatprep.subr.mxu0 0.0
    %966 = vmatpush2.msra.mxu0 0.0
    %967 = vmatprep.subr.mxu0 0.0
    %968 = vmatpush2.msra.mxu0 0.0
    %969 = vmatprep.subr.mxu0 0.0
    %970 = vmatpush2.msra.mxu0 0.0
    %971 = vmatprep.subr.mxu0 0.0
    %972 = vmatpush2.msra.mxu0 0.0
    %973 = vmatprep.subr.mxu0 0.0
    %974 = vmatpush2.msra.mxu0 0.0
    %975 = vmatprep.subr.mxu0 0.0
    %976 = vmatpush2.msra.mxu0 0.0
    %977 = vmatprep.subr.mxu0 0.0
    %978 = vmatpush2.msra.mxu0 0.0
    %979 = vmatprep.subr.mxu0 0.0
    %980 = vmatpush2.msra.mxu0 0.0
    %981 = vmatprep.subr.mxu0 0.0
    %982 = vmatpush2.msra.mxu0 0.0
    %983 = vmatprep.subr.mxu0 0.0
    %984 = vmatpush2.msra.mxu0 0.0
    %985 = vmatprep.mubr.f32.mxu0 0.0
    %986 = vmatmul.mubr.f32.gmra.mxu0 %v919
    %v987 = vpop.f32.mrf.mxu0
    %v988 = vadd.f32 0.0, %v987
    %v989 = vpop.f32.mrf.mxu0
    %990 = vdwg.mxu0
    %v992 = vsel %vm569, %v913, 0
    %994 = vmatprep.subr.mxu0 0.0
    %995 = vmatpush1.msra.mxu0 0.0
    %996 = vmatprep.subr.mxu0 0.0
    %997 = vmatpush1.msra.mxu0 0.0
    %998 = vmatprep.subr.mxu0 0.0
    %999 = vmatpush1.msra.mxu0 0.0
    %1000 = vmatprep.subr.mxu0 0.0
    %1001 = vmatpush1.msra.mxu0 0.0
    %1002 = vmatprep.subr.mxu0 0.0
    %1003 = vmatpush1.msra.mxu0 0.0
    %1004 = vmatprep.subr.mxu0 0.0
    %1005 = vmatpush1.msra.mxu0 0.0
    %1006 = vmatprep.subr.mxu0 0.0
    %1007 = vmatpush1.msra.mxu0 0.0
    %1008 = vmatprep.subr.mxu0 0.0
    %1009 = vmatpush1.msra.mxu0 0.0
    %1010 = vmatprep.subr.mxu0 0.0
    %1011 = vmatpush1.msra.mxu0 0.0
    %1012 = vmatprep.subr.mxu0 0.0
    %1013 = vmatpush1.msra.mxu0 0.0
    %1014 = vmatprep.subr.mxu0 0.0
    %1015 = vmatpush1.msra.mxu0 0.0
    %1016 = vmatprep.subr.mxu0 0.0
    %1017 = vmatpush1.msra.mxu0 0.0
    %1018 = vmatprep.subr.mxu0 0.0
    %1019 = vmatpush1.msra.mxu0 0.0
    %1020 = vmatprep.subr.mxu0 0.0
    %1021 = vmatpush1.msra.mxu0 0.0
    %1022 = vmatprep.subr.mxu0 0.0
    %1023 = vmatpush1.msra.mxu0 0.0
    %1024 = vmatprep.subr.mxu0 0.0
    %1025 = vmatpush1.msra.mxu0 %v566
    %1026 = vmatprep.subr.mxu0 0.0
    %1027 = vmatpush2.msra.mxu0 0.0
    %1028 = vmatprep.subr.mxu0 0.0
    %1029 = vmatpush2.msra.mxu0 0.0
    %1030 = vmatprep.subr.mxu0 0.0
    %1031 = vmatpush2.msra.mxu0 0.0
    %1032 = vmatprep.subr.mxu0 0.0
    %1033 = vmatpush2.msra.mxu0 0.0
    %1034 = vmatprep.subr.mxu0 0.0
    %1035 = vmatpush2.msra.mxu0 0.0
    %1036 = vmatprep.subr.mxu0 0.0
    %1037 = vmatpush2.msra.mxu0 0.0
    %1038 = vmatprep.subr.mxu0 0.0
    %1039 = vmatpush2.msra.mxu0 0.0
    %1040 = vmatprep.subr.mxu0 0.0
    %1041 = vmatpush2.msra.mxu0 0.0
    %1042 = vmatprep.subr.mxu0 0.0
    %1043 = vmatpush2.msra.mxu0 0.0
    %1044 = vmatprep.subr.mxu0 0.0
    %1045 = vmatpush2.msra.mxu0 0.0
    %1046 = vmatprep.subr.mxu0 0.0
    %1047 = vmatpush2.msra.mxu0 0.0
    %1048 = vmatprep.subr.mxu0 0.0
    %1049 = vmatpush2.msra.mxu0 0.0
    %1050 = vmatprep.subr.mxu0 0.0
    %1051 = vmatpush2.msra.mxu0 0.0
    %1052 = vmatprep.subr.mxu0 0.0
    %1053 = vmatpush2.msra.mxu0 0.0
    %1054 = vmatprep.subr.mxu0 0.0
    %1055 = vmatpush2.msra.mxu0 0.0
    %1056 = vmatprep.subr.mxu0 0.0
    %1057 = vmatpush2.msra.mxu0 0.0
    %1058 = vmatprep.mubr.f32.mxu0 0.0
    %1059 = vmatmul.mubr.f32.gmra.mxu0 %v992
    %v1060 = vpop.f32.mrf.mxu0
    %v1061 = vadd.f32 0.0, %v1060
    %v1062 = vpop.f32.mrf.mxu0
    %1063 = vdwg.mxu0
    %v1065 = vsel %vm569, %v915, 0
    %1067 = vmatprep.subr.mxu0 0.0
    %1068 = vmatpush1.msra.mxu0 0.0
    %1069 = vmatprep.subr.mxu0 0.0
    %1070 = vmatpush1.msra.mxu0 0.0
    %1071 = vmatprep.subr.mxu0 0.0
    %1072 = vmatpush1.msra.mxu0 0.0
    %1073 = vmatprep.subr.mxu0 0.0
    %1074 = vmatpush1.msra.mxu0 0.0
    %1075 = vmatprep.subr.mxu0 0.0
    %1076 = vmatpush1.msra.mxu0 0.0
    %1077 = vmatprep.subr.mxu0 0.0
    %1078 = vmatpush1.msra.mxu0 0.0
    %1079 = vmatprep.subr.mxu0 0.0
    %1080 = vmatpush1.msra.mxu0 0.0
    %1081 = vmatprep.subr.mxu0 0.0
    %1082 = vmatpush1.msra.mxu0 0.0
    %1083 = vmatprep.subr.mxu0 0.0
    %1084 = vmatpush1.msra.mxu0 0.0
    %1085 = vmatprep.subr.mxu0 0.0
    %1086 = vmatpush1.msra.mxu0 0.0
    %1087 = vmatprep.subr.mxu0 0.0
    %1088 = vmatpush1.msra.mxu0 0.0
    %1089 = vmatprep.subr.mxu0 0.0
    %1090 = vmatpush1.msra.mxu0 0.0
    %1091 = vmatprep.subr.mxu0 0.0
    %1092 = vmatpush1.msra.mxu0 0.0
    %1093 = vmatprep.subr.mxu0 0.0
    %1094 = vmatpush1.msra.mxu0 0.0
    %1095 = vmatprep.subr.mxu0 0.0
    %1096 = vmatpush1.msra.mxu0 0.0
    %1097 = vmatprep.subr.mxu0 0.0
    %1098 = vmatpush1.msra.mxu0 %v567
    %1099 = vmatprep.subr.mxu0 0.0
    %1100 = vmatpush2.msra.mxu0 0.0
    %1101 = vmatprep.subr.mxu0 0.0
    %1102 = vmatpush2.msra.mxu0 0.0
    %1103 = vmatprep.subr.mxu0 0.0
    %1104 = vmatpush2.msra.mxu0 0.0
    %1105 = vmatprep.subr.mxu0 0.0
    %1106 = vmatpush2.msra.mxu0 0.0
    %1107 = vmatprep.subr.mxu0 0.0
    %1108 = vmatpush2.msra.mxu0 0.0
    %1109 = vmatprep.subr.mxu0 0.0
    %1110 = vmatpush2.msra.mxu0 0.0
    %1111 = vmatprep.subr.mxu0 0.0
    %1112 = vmatpush2.msra.mxu0 0.0
    %1113 = vmatprep.subr.mxu0 0.0
    %1114 = vmatpush2.msra.mxu0 0.0
    %1115 = vmatprep.subr.mxu0 0.0
    %1116 = vmatpush2.msra.mxu0 0.0
    %1117 = vmatprep.subr.mxu0 0.0
    %1118 = vmatpush2.msra.mxu0 0.0
    %1119 = vmatprep.subr.mxu0 0.0
    %1120 = vmatpush2.msra.mxu0 0.0
    %1121 = vmatprep.subr.mxu0 0.0
    %1122 = vmatpush2.msra.mxu0 0.0
    %1123 = vmatprep.subr.mxu0 0.0
    %1124 = vmatpush2.msra.mxu0 0.0
    %1125 = vmatprep.subr.mxu0 0.0
    %1126 = vmatpush2.msra.mxu0 0.0
    %1127 = vmatprep.subr.mxu0 0.0
    %1128 = vmatpush2.msra.mxu0 0.0
    %1129 = vmatprep.subr.mxu0 0.0
    %1130 = vmatpush2.msra.mxu0 0.0
    %1131 = vmatprep.mubr.f32.mxu0 0.0
    %1132 = vmatmul.mubr.f32.gmra.mxu0 %v1065
    %v1133 = vpop.f32.mrf.mxu0
    %v1134 = vadd.f32 0.0, %v1133
    %v1135 = vpop.f32.mrf.mxu0
    %1136 = vdwg.mxu0
    %v1138 = vsel %vm569, %v917, 0
    %1140 = vmatprep.subr.mxu0 0.0
    %1141 = vmatpush1.msra.mxu0 0.0
    %1142 = vmatprep.subr.mxu0 0.0
    %1143 = vmatpush1.msra.mxu0 0.0
    %1144 = vmatprep.subr.mxu0 0.0
    %1145 = vmatpush1.msra.mxu0 0.0
    %1146 = vmatprep.subr.mxu0 0.0
    %1147 = vmatpush1.msra.mxu0 0.0
    %1148 = vmatprep.subr.mxu0 0.0
    %1149 = vmatpush1.msra.mxu0 0.0
    %1150 = vmatprep.subr.mxu0 0.0
    %1151 = vmatpush1.msra.mxu0 0.0
    %1152 = vmatprep.subr.mxu0 0.0
    %1153 = vmatpush1.msra.mxu0 0.0
    %1154 = vmatprep.subr.mxu0 0.0
    %1155 = vmatpush1.msra.mxu0 0.0
    %1156 = vmatprep.subr.mxu0 0.0
    %1157 = vmatpush1.msra.mxu0 0.0
    %1158 = vmatprep.subr.mxu0 0.0
    %1159 = vmatpush1.msra.mxu0 0.0
    %1160 = vmatprep.subr.mxu0 0.0
    %1161 = vmatpush1.msra.mxu0 0.0
    %1162 = vmatprep.subr.mxu0 0.0
    %1163 = vmatpush1.msra.mxu0 0.0
    %1164 = vmatprep.subr.mxu0 0.0
    %1165 = vmatpush1.msra.mxu0 0.0
    %1166 = vmatprep.subr.mxu0 0.0
    %1167 = vmatpush1.msra.mxu0 0.0
    %1168 = vmatprep.subr.mxu0 0.0
    %1169 = vmatpush1.msra.mxu0 0.0
    %1170 = vmatprep.subr.mxu0 0.0
    %1171 = vmatpush1.msra.mxu0 %v568
    %1172 = vmatprep.subr.mxu0 0.0
    %1173 = vmatpush2.msra.mxu0 0.0
    %1174 = vmatprep.subr.mxu0 0.0
    %1175 = vmatpush2.msra.mxu0 0.0
    %1176 = vmatprep.subr.mxu0 0.0
    %1177 = vmatpush2.msra.mxu0 0.0
    %1178 = vmatprep.subr.mxu0 0.0
    %1179 = vmatpush2.msra.mxu0 0.0
    %1180 = vmatprep.subr.mxu0 0.0
    %1181 = vmatpush2.msra.mxu0 0.0
    %1182 = vmatprep.subr.mxu0 0.0
    %1183 = vmatpush2.msra.mxu0 0.0
    %1184 = vmatprep.subr.mxu0 0.0
    %1185 = vmatpush2.msra.mxu0 0.0
    %1186 = vmatprep.subr.mxu0 0.0
    %1187 = vmatpush2.msra.mxu0 0.0
    %1188 = vmatprep.subr.mxu0 0.0
    %1189 = vmatpush2.msra.mxu0 0.0
    %1190 = vmatprep.subr.mxu0 0.0
    %1191 = vmatpush2.msra.mxu0 0.0
    %1192 = vmatprep.subr.mxu0 0.0
    %1193 = vmatpush2.msra.mxu0 0.0
    %1194 = vmatprep.subr.mxu0 0.0
    %1195 = vmatpush2.msra.mxu0 0.0
    %1196 = vmatprep.subr.mxu0 0.0
    %1197 = vmatpush2.msra.mxu0 0.0
    %1198 = vmatprep.subr.mxu0 0.0
    %1199 = vmatpush2.msra.mxu0 0.0
    %1200 = vmatprep.subr.mxu0 0.0
    %1201 = vmatpush2.msra.mxu0 0.0
    %1202 = vmatprep.subr.mxu0 0.0
    %1203 = vmatpush2.msra.mxu0 0.0
    %1204 = vmatprep.mubr.f32.mxu0 0.0
    %1205 = vmatmul.mubr.f32.gmra.mxu0 %v1138
    %v1206 = vpop.f32.mrf.mxu0
    %v1207 = vadd.f32 0.0, %v1206
    %v1208 = vpop.f32.mrf.mxu0
    %1209 = vdwg.mxu0
    %v1210 = vcombine.low %v988, %v1134
    %v1211 = vcombine.high %v988, %v1134
    %v1213 = vunpack.c.l.s4 1983009808
    %v1214 = vunpack.c.0.s8 %v1213
    %v1215 = vlaneseq
    %v1216 = vshrl.u32 %v1215, 7
    %v1217 = vsub.s32 %v1214, %v1216
    %v1218 = vrot.slane %v1210, %v1217
    %v1220 = vunpack.c.l.s4 1983009808
    %v1221 = vunpack.c.0.s8 %v1220
    %v1222 = vlaneseq
    %v1223 = vshrl.u32 %v1222, 7
    %v1224 = vsub.s32 %v1221, %v1223
    %v1225 = vrot.slane %v1211, %v1224
    %v1226 = vcombine.low %v1061, %v1207
    %v1227 = vcombine.high %v1061, %v1207
    %v1229 = vunpack.c.l.s4 1983009808
    %v1230 = vunpack.c.0.s8 %v1229
    %v1231 = vlaneseq
    %v1232 = vshrl.u32 %v1231, 7
    %v1233 = vsub.s32 %v1230, %v1232
    %v1234 = vrot.slane %v1226, %v1233
    %v1236 = vunpack.c.l.s4 1983009808
    %v1237 = vunpack.c.0.s8 %v1236
    %v1238 = vlaneseq
    %v1239 = vshrl.u32 %v1238, 7
    %v1240 = vsub.s32 %v1237, %v1239
    %v1241 = vrot.slane %v1227, %v1240
    %v1242 = vcombine.low %v1218, %v1234
    %v1243 = vcombine.high %v1218, %v1234
    %v1245 = vunpack.c.l.s4 1934713408
    %v1246 = vunpack.c.0.s8 %v1245
    %v1247 = vlaneseq
    %v1248 = vshrl.u32 %v1247, 7
    %v1249 = vsub.s32 %v1246, %v1248
    %v1250 = vrot.slane %v1242, %v1249
    %v1252 = vunpack.c.l.s4 1934713408
    %v1253 = vunpack.c.0.s8 %v1252
    %v1254 = vlaneseq
    %v1255 = vshrl.u32 %v1254, 7
    %v1256 = vsub.s32 %v1253, %v1255
    %v1257 = vrot.slane %v1243, %v1256
    %v1258 = vcombine.low %v1225, %v1241
    %v1259 = vcombine.high %v1225, %v1241
    %v1261 = vunpack.c.l.s4 1934713408
    %v1262 = vunpack.c.0.s8 %v1261
    %v1263 = vlaneseq
    %v1264 = vshrl.u32 %v1263, 7
    %v1265 = vsub.s32 %v1262, %v1264
    %v1266 = vrot.slane %v1258, %v1265
    %v1268 = vunpack.c.l.s4 1934713408
    %v1269 = vunpack.c.0.s8 %v1268
    %v1270 = vlaneseq
    %v1271 = vshrl.u32 %v1270, 7
    %v1272 = vsub.s32 %v1269, %v1271
    %v1273 = vrot.slane %v1259, %v1272
    %v1274 = vcombine.high %v1250, 0.0
    %v1275 = vcombine.high %v1257, 0.0
    %v1276 = vcombine.high %v1266, 0.0
    %v1277 = vcombine.high %v1273, 0.0
    %v1278 = vcombine.low %v1250, %v1257
    %v1280 = vunpack.c.l.s4 1983009808
    %v1281 = vunpack.c.0.s8 %v1280
    %v1282 = vlaneseq
    %v1283 = vshrl.u32 %v1282, 7
    %v1284 = vsub.s32 %v1281, %v1283
    %v1285 = vrot.slane %v1278, %v1284
    %v1286 = vcombine.low %v1274, %v1275
    %v1288 = vunpack.c.l.s4 1983009808
    %v1289 = vunpack.c.0.s8 %v1288
    %v1290 = vlaneseq
    %v1291 = vshrl.u32 %v1290, 7
    %v1292 = vsub.s32 %v1289, %v1291
    %v1293 = vrot.slane %v1286, %v1292
    %v1294 = vcombine.low %v1266, %v1273
    %v1296 = vunpack.c.l.s4 1983009808
    %v1297 = vunpack.c.0.s8 %v1296
    %v1298 = vlaneseq
    %v1299 = vshrl.u32 %v1298, 7
    %v1300 = vsub.s32 %v1297, %v1299
    %v1301 = vrot.slane %v1294, %v1300
    %v1302 = vcombine.low %v1276, %v1277
    %v1304 = vunpack.c.l.s4 1983009808
    %v1305 = vunpack.c.0.s8 %v1304
    %v1306 = vlaneseq
    %v1307 = vshrl.u32 %v1306, 7
    %v1308 = vsub.s32 %v1305, %v1307
    %v1309 = vrot.slane %v1302, %v1308
    %v1310 = vcombine.low %v1285, %v1293
    %v1311 = vcombine.high %v1285, %v1293
    %v1313 = vunpack.c.l.s4 1934713408
    %v1314 = vunpack.c.0.s8 %v1313
    %v1315 = vlaneseq
    %v1316 = vshrl.u32 %v1315, 7
    %v1317 = vsub.s32 %v1314, %v1316
    %v1318 = vrot.slane %v1310, %v1317
    %v1320 = vunpack.c.l.s4 1934713408
    %v1321 = vunpack.c.0.s8 %v1320
    %v1322 = vlaneseq
    %v1323 = vshrl.u32 %v1322, 7
    %v1324 = vsub.s32 %v1321, %v1323
    %v1325 = vrot.slane %v1311, %v1324
    %v1326 = vcombine.low %v1301, %v1309
    %v1327 = vcombine.high %v1301, %v1309
    %v1329 = vunpack.c.l.s4 1934713408
    %v1330 = vunpack.c.0.s8 %v1329
    %v1331 = vlaneseq
    %v1332 = vshrl.u32 %v1331, 7
    %v1333 = vsub.s32 %v1330, %v1332
    %v1334 = vrot.slane %v1326, %v1333
    %v1336 = vunpack.c.l.s4 1934713408
    %v1337 = vunpack.c.0.s8 %v1336
    %v1338 = vlaneseq
    %v1339 = vshrl.u32 %v1338, 7
    %v1340 = vsub.s32 %v1337, %v1339
    %v1341 = vrot.slane %v1327, %v1340
    %v1342 = vcombine.low %v1318, %v1334
    %v1343 = vcombine.high %v1318, %v1334
    %v1344 = vcombine.low %v1325, %v1341
    %v1345 = vcombine.high %v1325, %v1341
    %1347 = vrot.lane.b32.xlu0 %v1343, 8
    %v1348 = vpop.permute.xlu0 %1347
    %1351 = vrot.lane.b32.xlu0 %v1344, 16
    %v1352 = vpop.permute.xlu0 %1351
    %1355 = vrot.lane.b32.xlu0 %v1345, 24
    %v1356 = vpop.permute.xlu0 %1355
    %v1358 = vsel %vm569, %v1342, %v1348
    %vm1359 = vcmask 130048
    %v1360 = vsel %vm1359, %v1358, %v1352
    %vm1361 = vcmask 195584
    %v1362 = vsel %vm1361, %v1360, %v1356
    %1363 = vst.msk [vmem:[#allocation7] sm:$0xff] %vm53, %v1362
    // Predicated region
    $region22: #{tpu_custom_call.1} parent=1 // pred_check
      _
    $region23: #{tpu_custom_call.1} parent=1 // pred_check_branch
      %1365 = sbr.rel (0) target = $region25
    $region24: #{tpu_custom_call.1} parent=1 // pred_region
      %s1367 = ssub.s32 128, 128
      %1368 = vsyncadd [#allocation4], %s1367
      %s1370 = sshll.u32 [#allocation7], 4
      %s1371 = int_to_ptr.vmem [resolvable:$true] %s1370
      %1373 = dma.vmem_to_hbm [thread:$0]  %s1371, 128, %s3, [#allocation4]
    $region25: #{tpu_custom_call.1} parent=1 // pred_fallthru
      _
    // Predicated region
    $region26: #{tpu_custom_call.1} parent=1 // pred_check
      _
    $region27: #{tpu_custom_call.1} parent=1 // pred_check_branch
      %1375 = sbr.rel (0) target = $region29
    $region28: #{tpu_custom_call.1} parent=1 // pred_region
      %1376 = dma.done [#allocation4], 128
    $region29: #{tpu_custom_call.1} parent=1 // pred_fallthru
      _
    %1377 = vsyncpa [#allocation3], 1
    %1378 = vsyncpa [#allocation6], 1
    %1379 = vsyncpa [#allocation4], 1

</llo_original>
